<compile_context>
chip_gen: v6e
topology: v6e:2x2x1
jax: 0.10.0
libtpu: 0.0.40
codegen_flags: <defaults>
</compile_context>

<pallas_src>
import functools

import jax
import jax.numpy as jnp
from jax.experimental import pallas as pl
from jax.experimental.pallas import tpu as pltpu

EPS = 1e-12          # matches torch F.normalize eps
NEG_INF = -1e30      # finite "minus infinity" (avoids inf - inf -> NaN)


def _l2_normalize_approx(x):
    """Row L2-normalize with EUP approx reciprocal (feeds bf16 MXU inputs)."""
    n = jnp.sqrt(jnp.sum(x * x, axis=1, keepdims=True))
    return x * pl.reciprocal(jnp.maximum(n, EPS), approx=True)


def _cat(parts):
    return parts[0] if len(parts) == 1 else jnp.concatenate(parts, axis=1)


# ------------------------------------------------------------------ kernels --

def _project_kernel(ent_ref, w_ref, wh_ref, f_ref):
    """Fused: L2-normalize entity rows; one wide bf16 MXU matmul emits
    [Wh for all heads | f_src | f_dst | pad]; both outputs lane-dense."""
    xn = _l2_normalize_approx(ent_ref[...])                      # (tr, D) f32
    y = jnp.dot(xn.astype(jnp.bfloat16), w_ref[...],
                preferred_element_type=jnp.float32)              # (tr, Hout+128)
    hout = wh_ref.shape[1]
    wh_ref[...] = y[:, :hout].astype(jnp.bfloat16)               # (tr, Hout)
    f_ref[...] = y[:, hout:]                                     # (tr, 128) f32


def _gat_flash_kernel(alpha, H, Dout, tk,
                      fsrc_ref, mmax_ref, fdst_ref, adj_ref, wh_ref,
                      ent_ref, we_ref, mask_ref, out_ref, l_sc):
    """One (q-tile, k-tile) step of head-fused masked-softmax attention with
    the combine + final-L2-normalize epilogue fused into the last k step."""
    ki = pl.program_id(1)

    @pl.when(ki == 0)
    def _():
        l_sc[...] = jnp.zeros_like(l_sc)
        out_ref[...] = jnp.zeros_like(out_ref)    # accumulate directly in out

    k0 = pl.multiple_of(ki * tk, tk)
    edge = adj_ref[...] != 0                                     # (tq, tk)
    wh_k = wh_ref[pl.ds(k0, tk), :]                              # (tk, Hout) bf16 (resident)
    f_src = fsrc_ref[...]                                        # (tq, H) f32
    f_dst = fdst_ref[...]                                        # (H, tk) f32
    m = mmax_ref[...]                                            # (tq, H) safe shift

    acc_parts = []
    for h in range(H):
        e = f_src[:, h:h + 1] + f_dst[h:h + 1, :]                # (tq, tk) logits
        e = jnp.where(e > 0, e, alpha * e)                       # LeakyReLU(alpha)
        e = jnp.where(edge, e, NEG_INF)                          # mask non-edges
        p = jnp.exp(e - m[:, h:h + 1])                           # bounded: e <= m
        l_sc[h] = l_sc[h] + jnp.sum(p, axis=1, keepdims=True)
        acc_parts.append(jnp.dot(p.astype(wh_k.dtype),
                                 wh_k[:, h * Dout:(h + 1) * Dout],
                                 preferred_element_type=jnp.float32))
    out_ref[...] += _cat(acc_parts)                              # (tq, Hout) f32

    @pl.when(ki == pl.num_programs(1) - 1)
    def _():
        acc = out_ref[...]                                       # (tq, Hout)
        gat_parts = []
        for h in range(H):
            inv_l = pl.reciprocal(jnp.maximum(l_sc[h], EPS), approx=True)
            g = acc[:, h * Dout:(h + 1) * Dout] * inv_l
            # ELU: exp only on the clamped negative part (no overflow)
            gat_parts.append(jnp.where(g > 0, g,
                                       jnp.exp(jnp.minimum(g, 0.0)) - 1.0))
        gat = _cat(gat_parts)                                    # (tq, Hout)
        # fused combine: L2norm(ent) @ W_entities + mask * gat, then L2norm
        xn = _l2_normalize_approx(ent_ref[...])
        y = jnp.dot(xn.astype(jnp.bfloat16), we_ref[...],
                    preferred_element_type=jnp.float32)
        y = y + mask_ref[...] * gat
        n2 = jnp.sqrt(jnp.sum(y * y, axis=1, keepdims=True))
        out_ref[...] = y / jnp.maximum(n2, EPS)                  # exact (visible output)


def _relation_kernel(rel_ref, w_ref, o_ref):
    """out_relation = L2norm(relation_emb) @ W_rel (tiny, single block)."""
    rn = _l2_normalize_approx(rel_ref[...])
    o_ref[...] = jnp.dot(rn.astype(jnp.bfloat16), w_ref[...],
                         preferred_element_type=jnp.float32)


# ------------------------------------------------------------------- driver --

def _pick_tile(n, pref):
    for t in (pref, 512, 256, 128):
        if t <= n and n % t == 0:
            return t
    return n


def gat_forward(entity_emb, relation_emb, adj_mask, train_indices,
                W_entities, W_head, a_head, W_rel, alpha,
                tq=512, tk=512, tr=512):
    N, D = entity_emb.shape
    H, _, Dout = W_head.shape
    Hout = H * Dout
    F_PAD = ((2 * H + 127) // 128) * 128      # lane-dense attention-preact width

    tq = _pick_tile(N, tq)
    tk = _pick_tile(N, tk)
    tr = _pick_tile(N, tr)

    # ---- wrapper-side weight prep (tiny) ------------------------------------
    W_all = jnp.transpose(W_head, (1, 0, 2)).reshape(D, Hout)        # (D, H*Dout)
    a_src, a_dst = a_head[:, 0, :], a_head[:, 1, :]                  # (H, Dout)
    v_src = jnp.einsum('hdo,ho->dh', W_head, a_src)                  # (D, H)
    v_dst = jnp.einsum('hdo,ho->dh', W_head, a_dst)                  # (D, H)
    W_big = jnp.concatenate(
        [W_all, v_src, v_dst, jnp.zeros((D, F_PAD - 2 * H), W_all.dtype)],
        axis=1).astype(jnp.bfloat16)                                 # (D, Hout+F_PAD)

    # ---- 1) fused L2-normalize + projection (Wh and f in ONE matmul) --------
    wh_all, f_pad = pl.pallas_call(
        _project_kernel,
        out_shape=(jax.ShapeDtypeStruct((N, Hout), jnp.bfloat16),
                   jax.ShapeDtypeStruct((N, F_PAD), jnp.float32)),
        grid_spec=pltpu.PrefetchScalarGridSpec(
            num_scalar_prefetch=0,
            grid=(N // tr,),
            in_specs=[pl.BlockSpec((tr, D), lambda r: (r, 0)),
                      pl.BlockSpec((D, Hout + F_PAD), lambda r: (0, 0))],
            out_specs=[pl.BlockSpec((tr, Hout), lambda r: (r, 0)),
                       pl.BlockSpec((tr, F_PAD), lambda r: (r, 0))]),
        compiler_params=pltpu.CompilerParams(
            dimension_semantics=("parallel",)),
    )(entity_emb, W_big)

    f_src = f_pad[:, :H]                                             # (N, H)
    f_dstT = jnp.transpose(f_pad[:, H:2 * H])                        # (H, N)
    # Precomputed safe softmax shift: leaky_relu(fs+fd) <= max(0, fs + max_j fd_j).
    # Replaces the online running max (drops corr rescales / loop-carried dep);
    # rows with zero edges naturally produce a zero GAT output.
    mmax = jnp.maximum(0.0, f_src + jnp.max(f_dstT, axis=1)[None, :])  # (N, H)

    # ---- 2) mask over tail entities of the train triples --------------------
    # (scatter; no clean Pallas equivalent -> plain JAX)
    mask = jnp.zeros((N,), jnp.float32).at[train_indices[:, 2]].set(1.0)[:, None]

    # ---- 3) head-fused flash GAT + fused combine/normalize epilogue ---------
    # VMEM (demo sizes) is tiny; for large N budget 2*N*Hout*2 B for the
    # resident Wh block and set vmem_limit_bytes / fall back to tiled Wh.
    kernel = functools.partial(_gat_flash_kernel, float(alpha), H, Dout, tk)
    out_entity = pl.pallas_call(
        kernel,
        out_shape=jax.ShapeDtypeStruct((N, Hout), jnp.float32),
        grid_spec=pltpu.PrefetchScalarGridSpec(
            num_scalar_prefetch=0,
            grid=(N // tq, N // tk),
            in_specs=[
                pl.BlockSpec((tq, H), lambda qi, ki: (qi, 0)),       # f_src (queries)
                pl.BlockSpec((tq, H), lambda qi, ki: (qi, 0)),       # softmax shift
                pl.BlockSpec((H, tk), lambda qi, ki: (0, ki)),       # f_dst (keys)
                pl.BlockSpec((tq, tk), lambda qi, ki: (qi, ki)),     # adjacency int8 (read once)
                pl.BlockSpec((N, Hout), lambda qi, ki: (0, 0)),      # Wh: VMEM-resident, all heads
                pl.BlockSpec((tq, D), lambda qi, ki: (qi, 0)),       # entity rows (epilogue)
                pl.BlockSpec((D, Hout), lambda qi, ki: (0, 0)),      # W_entities (resident)
                pl.BlockSpec((tq, 1), lambda qi, ki: (qi, 0)),       # tail mask
            ],
            out_specs=pl.BlockSpec((tq, Hout), lambda qi, ki: (qi, 0)),
            scratch_shapes=[pltpu.VMEM((H, tq, 1), jnp.float32)]),   # softmax denominators
        compiler_params=pltpu.CompilerParams(
            dimension_semantics=("parallel", "arbitrary")),
    )(f_src, mmax, f_dstT, adj_mask, wh_all,
      entity_emb, W_entities.astype(jnp.bfloat16), mask)

    # ---- 4) relations: fused normalize + W_rel matmul (R is small) ----------
    out_relation = pl.pallas_call(
        _relation_kernel,
        out_shape=jax.ShapeDtypeStruct((relation_emb.shape[0], Hout),
                                       jnp.float32),
    )(relation_emb, W_rel.astype(jnp.bfloat16))

    return out_entity, out_relation


if __name__ == "__main__":
    # small but TPU-tile-aligned synthetic problem
    N, R, D, H = 256, 16, 128, 2     # nodes, relations, dim, n_heads
    Dout = D                         # entity_out_dim == dim
    alpha = 0.2                      # alpha_gat (LeakyReLU slope)

    key = jax.random.PRNGKey(0)
    ks = jax.random.split(key, 10)

    entity_emb = jax.random.normal(ks[0], (N, D), jnp.float32)
    relation_emb = jax.random.normal(ks[1], (R, D), jnp.float32)
    # xavier_uniform-like deterministic init for W_entities (gain=1.414)
    bound = 1.414 * (6.0 / (D + Dout * H)) ** 0.5
    W_entities = jax.random.uniform(ks[2], (D, Dout * H), jnp.float32,
                                    -bound, bound)
    W_head = jax.random.normal(ks[3], (H, D, Dout), jnp.float32) * 0.1
    a_head = jax.random.normal(ks[4], (H, 2, Dout), jnp.float32) * 0.1
    W_rel = jax.random.normal(ks[5], (D, Dout * H), jnp.float32) * 0.1

    # edge_list (adj[0]) -> dense int8 adjacency mask with self-loops
    E = 2048
    src = jax.random.randint(ks[6], (E,), 0, N)
    dst = jax.random.randint(ks[7], (E,), 0, N)
    adj_mask = jnp.zeros((N, N), jnp.int8).at[dst, src].set(1)
    adj_mask = jnp.maximum(adj_mask, jnp.eye(N, dtype=jnp.int8))

    # train_indices: (T, 3) triples (head, relation, tail)
    T = 64
    h_idx = jax.random.randint(ks[8], (T,), 0, N)
    r_idx = jax.random.randint(ks[9], (T,), 0, R)
    t_idx = jax.random.randint(jax.random.PRNGKey(1), (T,), 0, N)
    train_indices = jnp.stack([h_idx, r_idx, t_idx], axis=1)

    out_entity, out_relation = gat_forward(
        entity_emb, relation_emb, adj_mask, train_indices,
        W_entities, W_head, a_head, W_rel, alpha)

    jax.block_until_ready((out_entity, out_relation))
    assert out_entity.shape == (N, Dout * H)
    assert out_relation.shape == (R, Dout * H)
    assert bool(jnp.all(jnp.isfinite(out_entity)))
    assert bool(jnp.all(jnp.isfinite(out_relation)))
    print("KERNEL_OK")
</pallas_src>

<mosaic_0001>
module attributes {stable_mosaic.version = 11 : i64} {
  func.func @_project_kernel(%arg0: i32, %arg1: memref<256x128xf32, #tpu.memory_space<vmem>>, %arg2: memref<128x384xbf16, #tpu.memory_space<vmem>>, %arg3: memref<256x256xbf16, #tpu.memory_space<vmem>>, %arg4: memref<256x128xf32, #tpu.memory_space<vmem>>) attributes {dimension_semantics = [#tpu.dimension_semantics<parallel>], iteration_bounds = array<i64: 1>, scalar_prefetch = 0 : i64, scratch_operands = 0 : i64, tpu.core_type = #tpu.core_type<tc>, window_params = [{transform_indices = @transform_0, window_bounds = array<i64: 256, 128>}, {pipeline_mode = #tpu.pipeline_mode<synchronous>, transform_indices = @transform_1, window_bounds = array<i64: 128, 384>}, {transform_indices = @transform_2, window_bounds = array<i64: 256, 256>}, {transform_indices = @transform_3, window_bounds = array<i64: 256, 128>}]} {
    %c0 = arith.constant 0 : index
    %c0_0 = arith.constant 0 : index
    %0 = vector.load %arg1[%c0, %c0_0] : memref<256x128xf32, #tpu.memory_space<vmem>>, vector<256x128xf32>
    %1 = arith.mulf %0, %0 : vector<256x128xf32>
    %cst = arith.constant dense<0.000000e+00> : vector<256xf32>
    %2 = vector.multi_reduction <add>, %1, %cst [1] : vector<256x128xf32> to vector<256xf32>
    %3 = vector.shape_cast %2 : vector<256xf32> to vector<256x1xf32>
    %4 = math.sqrt %3 : vector<256x1xf32>
    %cst_1 = arith.constant 9.99999996E-13 : f32
    %5 = vector.broadcast %cst_1 : f32 to vector<256x1xf32>
    %6 = arith.maximumf %4, %5 : vector<256x1xf32>
    %7 = tpu.reciprocal %6 {approx = true} : vector<256x1xf32> -> vector<256x1xf32>
    %8 = vector.broadcast %7 : vector<256x1xf32> to vector<256x128xf32>
    %9 = arith.mulf %0, %8 : vector<256x128xf32>
    %10 = arith.truncf %9 : vector<256x128xf32> to vector<256x128xbf16>
    %c0_2 = arith.constant 0 : index
    %c0_3 = arith.constant 0 : index
    %11 = vector.load %arg2[%c0_2, %c0_3] : memref<128x384xbf16, #tpu.memory_space<vmem>>, vector<128x384xbf16>
    %cst_4 = arith.constant dense<0.000000e+00> : vector<256x384xf32>
    %12 = tpu.matmul %10, %11, %cst_4 {dimension_numbers = #tpu.dot_dimension_numbers<[1], [0], [0], [1], [0, 0, 1, 1], [], []>} : vector<256x128xbf16>, vector<128x384xbf16>, vector<256x384xf32> -> vector<256x384xf32>
    %13 = vector.extract_strided_slice %12 {offsets = [0, 0], sizes = [256, 256], strides = [1, 1]} : vector<256x384xf32> to vector<256x256xf32>
    %14 = arith.truncf %13 : vector<256x256xf32> to vector<256x256xbf16>
    %c0_5 = arith.constant 0 : index
    %c0_6 = arith.constant 0 : index
    %15 = vector.load %arg3[%c0_5, %c0_6] : memref<256x256xbf16, #tpu.memory_space<vmem>>, vector<256x256xbf16>
    tpu.vector_store %arg3[%c0_5, %c0_6], %14 {strides = array<i32>} : memref<256x256xbf16, #tpu.memory_space<vmem>>, vector<256x256xbf16>,
    %16 = vector.extract_strided_slice %12 {offsets = [0, 256], sizes = [256, 128], strides = [1, 1]} : vector<256x384xf32> to vector<256x128xf32>
    %c0_7 = arith.constant 0 : index
    %c0_8 = arith.constant 0 : index
    %17 = vector.load %arg4[%c0_7, %c0_8] : memref<256x128xf32, #tpu.memory_space<vmem>>, vector<256x128xf32>
    tpu.vector_store %arg4[%c0_7, %c0_8], %16 {strides = array<i32>} : memref<256x128xf32, #tpu.memory_space<vmem>>, vector<256x128xf32>,
    return
  }
  func.func @transform_0(%arg0: i32) -> (i32, i32) {
    %c0_i32 = arith.constant 0 : i32
    %c0_i32_0 = arith.constant 0 : i32
    return %arg0, %c0_i32 : i32, i32
  }
  func.func @transform_1(%arg0: i32) -> (i32, i32) {
    %c0_i32 = arith.constant 0 : i32
    %c0_i32_0 = arith.constant 0 : i32
    %c0_i32_1 = arith.constant 0 : i32
    return %c0_i32, %c0_i32_0 : i32, i32
  }
  func.func @transform_2(%arg0: i32) -> (i32, i32) {
    %c0_i32 = arith.constant 0 : i32
    %c0_i32_0 = arith.constant 0 : i32
    return %arg0, %c0_i32 : i32, i32
  }
  func.func @transform_3(%arg0: i32) -> (i32, i32) {
    %c0_i32 = arith.constant 0 : i32
    %c0_i32_0 = arith.constant 0 : i32
    return %arg0, %c0_i32 : i32, i32
  }
}

</mosaic_0001>

<llo_original>
// kernel: tpu_custom_call.1
$region0: #{tpu_custom_call.1}
  #allocation0 [shape = 'u32[]', space=smem, size = 0x4, offset = 0x4, fixed_abs, tag = 'smem constant byte address 0x4 - core index']
  #allocation1 [shape = 'u32[144,128]{1,0:T(1,128)}', space=vmem, size = 0x12000, scoped, tag = 'internal scratch']
  %s0 = inlined_call_operand.hbm [shape: f32[256,128], index: 0, kind: input, shape index: {}]
  %s1 = inlined_call_operand.hbm [shape: bf16[128,384], index: 1, kind: input, shape index: {}]
  %s2 = inlined_call_operand.hbm [shape: bf16[256,256], index: 2, kind: output, shape index: {0}]
  %s3 = inlined_call_operand.hbm [shape: f32[256,128], index: 3, kind: output, shape index: {1}]
  %4 = xla_tuple %s2, %s3
  %s5 = sld [smem:[#allocation0]]
  $region34: #{tpu_custom_call.1} parent=0
    _
  %s7 = ssub.s32 1, %s5
  %s8 = scalar_select 0, %s7, %s5
  $region1: #{tpu_custom_call.1} parent=0
    #allocation2 [shape = 'u8[131072]{0}', space=vmem, size = 0x20000, scoped, tag = 'input window, operand 0, single buffered']
    #allocation3 [shape = 's32[1]{0}', space=sflag, size = 0x4, scoped, tag = 'scoped memory for tpu_custom_call.1']
    #allocation4 [shape = 's32[1]{0}', space=sflag, size = 0x4, scoped, tag = 'scoped memory for tpu_custom_call.1']
    #allocation5 [shape = 'u8[98304]{0}', space=vmem, size = 0x18000, scoped, tag = 'input window, operand 1, single buffered']
    #allocation6 [shape = 's32[1]{0}', space=sflag, size = 0x4, scoped, tag = 'scoped memory for tpu_custom_call.1']
    #allocation7 [shape = 'u8[131072]{0}', space=vmem, size = 0x20000, scoped, tag = 'output window, operand 0, single buffered']
    #allocation8 [shape = 'u8[131072]{0}', space=vmem, size = 0x20000, scoped, tag = 'output window, operand 1, single buffered']
    #allocation9 [shape = 's32[1]{0}', space=sflag, size = 0x4, scoped, tag = 'scoped memory for tpu_custom_call.1']
    %9 = vsyncpa [#allocation3], 0
    %10 = vsyncpa [#allocation6], 0
    %11 = vsyncpa [#allocation4], 0
    %12 = vsyncpa [#allocation9], 0
    // Predicated region
    $region2: #{tpu_custom_call.1} parent=1 // pred_check
      _
    $region3: #{tpu_custom_call.1} parent=1 // pred_check_branch
      %14 = sbr.rel (0) target = $region5
    $region4: #{tpu_custom_call.1} parent=1 // pred_region
      %s16 = ssub.s32 4096, 4096
      %17 = vsyncadd [#allocation3], %s16
      %s18 = sshll.u32 [#allocation2], 4
      %s19 = int_to_ptr.vmem [resolvable:$true] %s18
      %24 = dma.hbm_to_vmem [thread:$0]  %s0, 4096, %s19, [#allocation3], 128, 128, 8
    $region5: #{tpu_custom_call.1} parent=1 // pred_fallthru
      _
    // Predicated region
    $region6: #{tpu_custom_call.1} parent=1 // pred_check
      _
    $region7: #{tpu_custom_call.1} parent=1 // pred_check_branch
      %26 = sbr.rel (0) target = $region9
    $region8: #{tpu_custom_call.1} parent=1 // pred_region
      %s28 = ssub.s32 3072, 3072
      %29 = vsyncadd [#allocation6], %s28
      %s30 = sshll.u32 [#allocation5], 4
      %s31 = int_to_ptr.vmem [resolvable:$true] %s30
      %36 = dma.hbm_to_vmem [thread:$0]  %s1, 3072, %s31, [#allocation6], 192, 192, 12
    $region9: #{tpu_custom_call.1} parent=1 // pred_fallthru
      _
    // Predicated region
    $region10: #{tpu_custom_call.1} parent=1 // pred_check
      _
    $region11: #{tpu_custom_call.1} parent=1 // pred_check_branch
      %38 = sbr.rel (0) target = $region13
    $region12: #{tpu_custom_call.1} parent=1 // pred_region
      %39 = dma.done [#allocation3], 4096
    $region13: #{tpu_custom_call.1} parent=1 // pred_fallthru
      _
    // Predicated region
    $region14: #{tpu_custom_call.1} parent=1 // pred_check
      _
    $region15: #{tpu_custom_call.1} parent=1 // pred_check_branch
      %41 = sbr.rel (0) target = $region17
    $region16: #{tpu_custom_call.1} parent=1 // pred_region
      %42 = dma.done [#allocation6], 3072
    $region17: #{tpu_custom_call.1} parent=1 // pred_fallthru
      _
    %v44 = vld [vmem:[#allocation2] sm:$0xff]
    %v45 = vld [vmem:[#allocation2 + $0x8] sm:$0xff]
    %v46 = vld [vmem:[#allocation2 + $0x10] sm:$0xff]
    %v47 = vld [vmem:[#allocation2 + $0x18] sm:$0xff]
    %v48 = vld [vmem:[#allocation2 + $0x20] sm:$0xff]
    %v49 = vld [vmem:[#allocation2 + $0x28] sm:$0xff]
    %v50 = vld [vmem:[#allocation2 + $0x30] sm:$0xff]
    %v51 = vld [vmem:[#allocation2 + $0x38] sm:$0xff]
    %v52 = vld [vmem:[#allocation2 + $0x40] sm:$0xff]
    %v53 = vld [vmem:[#allocation2 + $0x48] sm:$0xff]
    %v54 = vld [vmem:[#allocation2 + $0x50] sm:$0xff]
    %v55 = vld [vmem:[#allocation2 + $0x58] sm:$0xff]
    %v56 = vld [vmem:[#allocation2 + $0x60] sm:$0xff]
    %v57 = vld [vmem:[#allocation2 + $0x68] sm:$0xff]
    %v58 = vld [vmem:[#allocation2 + $0x70] sm:$0xff]
    %v59 = vld [vmem:[#allocation2 + $0x78] sm:$0xff]
    %v60 = vld [vmem:[#allocation2 + $0x80] sm:$0xff]
    %v61 = vld [vmem:[#allocation2 + $0x88] sm:$0xff]
    %v62 = vld [vmem:[#allocation2 + $0x90] sm:$0xff]
    %v63 = vld [vmem:[#allocation2 + $0x98] sm:$0xff]
    %v64 = vld [vmem:[#allocation2 + $0xa0] sm:$0xff]
    %v65 = vld [vmem:[#allocation2 + $0xa8] sm:$0xff]
    %v66 = vld [vmem:[#allocation2 + $0xb0] sm:$0xff]
    %v67 = vld [vmem:[#allocation2 + $0xb8] sm:$0xff]
    %v68 = vld [vmem:[#allocation2 + $0xc0] sm:$0xff]
    %v69 = vld [vmem:[#allocation2 + $0xc8] sm:$0xff]
    %v70 = vld [vmem:[#allocation2 + $0xd0] sm:$0xff]
    %v71 = vld [vmem:[#allocation2 + $0xd8] sm:$0xff]
    %v72 = vld [vmem:[#allocation2 + $0xe0] sm:$0xff]
    %v73 = vld [vmem:[#allocation2 + $0xe8] sm:$0xff]
    %v74 = vld [vmem:[#allocation2 + $0xf0] sm:$0xff]
    %v75 = vld [vmem:[#allocation2 + $0xf8] sm:$0xff]
    %v76 = vmul.f32 %v44, %v44
    %v77 = vmul.f32 %v45, %v45
    %v78 = vmul.f32 %v46, %v46
    %v79 = vmul.f32 %v47, %v47
    %v80 = vmul.f32 %v48, %v48
    %v81 = vmul.f32 %v49, %v49
    %v82 = vmul.f32 %v50, %v50
    %v83 = vmul.f32 %v51, %v51
    %v84 = vmul.f32 %v52, %v52
    %v85 = vmul.f32 %v53, %v53
    %v86 = vmul.f32 %v54, %v54
    %v87 = vmul.f32 %v55, %v55
    %v88 = vmul.f32 %v56, %v56
    %v89 = vmul.f32 %v57, %v57
    %v90 = vmul.f32 %v58, %v58
    %v91 = vmul.f32 %v59, %v59
    %v92 = vmul.f32 %v60, %v60
    %v93 = vmul.f32 %v61, %v61
    %v94 = vmul.f32 %v62, %v62
    %v95 = vmul.f32 %v63, %v63
    %v96 = vmul.f32 %v64, %v64
    %v97 = vmul.f32 %v65, %v65
    %v98 = vmul.f32 %v66, %v66
    %v99 = vmul.f32 %v67, %v67
    %v100 = vmul.f32 %v68, %v68
    %v101 = vmul.f32 %v69, %v69
    %v102 = vmul.f32 %v70, %v70
    %v103 = vmul.f32 %v71, %v71
    %v104 = vmul.f32 %v72, %v72
    %v105 = vmul.f32 %v73, %v73
    %v106 = vmul.f32 %v74, %v74
    %v107 = vmul.f32 %v75, %v75
    %108 = vadd.xlane.f32.xlu0 %v76
    %v109 = vpop.xlane.xlu0 %108
    %110 = vadd.xlane.f32.xlu0 %v77
    %v111 = vpop.xlane.xlu0 %110
    %112 = vadd.xlane.f32.xlu0 %v78
    %v113 = vpop.xlane.xlu0 %112
    %114 = vadd.xlane.f32.xlu0 %v79
    %v115 = vpop.xlane.xlu0 %114
    %116 = vadd.xlane.f32.xlu0 %v80
    %v117 = vpop.xlane.xlu0 %116
    %118 = vadd.xlane.f32.xlu0 %v81
    %v119 = vpop.xlane.xlu0 %118
    %120 = vadd.xlane.f32.xlu0 %v82
    %v121 = vpop.xlane.xlu0 %120
    %122 = vadd.xlane.f32.xlu0 %v83
    %v123 = vpop.xlane.xlu0 %122
    %124 = vadd.xlane.f32.xlu0 %v84
    %v125 = vpop.xlane.xlu0 %124
    %126 = vadd.xlane.f32.xlu0 %v85
    %v127 = vpop.xlane.xlu0 %126
    %128 = vadd.xlane.f32.xlu0 %v86
    %v129 = vpop.xlane.xlu0 %128
    %130 = vadd.xlane.f32.xlu0 %v87
    %v131 = vpop.xlane.xlu0 %130
    %132 = vadd.xlane.f32.xlu0 %v88
    %v133 = vpop.xlane.xlu0 %132
    %134 = vadd.xlane.f32.xlu0 %v89
    %v135 = vpop.xlane.xlu0 %134
    %136 = vadd.xlane.f32.xlu0 %v90
    %v137 = vpop.xlane.xlu0 %136
    %138 = vadd.xlane.f32.xlu0 %v91
    %v139 = vpop.xlane.xlu0 %138
    %140 = vadd.xlane.f32.xlu0 %v92
    %v141 = vpop.xlane.xlu0 %140
    %142 = vadd.xlane.f32.xlu0 %v93
    %v143 = vpop.xlane.xlu0 %142
    %144 = vadd.xlane.f32.xlu0 %v94
    %v145 = vpop.xlane.xlu0 %144
    %146 = vadd.xlane.f32.xlu0 %v95
    %v147 = vpop.xlane.xlu0 %146
    %148 = vadd.xlane.f32.xlu0 %v96
    %v149 = vpop.xlane.xlu0 %148
    %150 = vadd.xlane.f32.xlu0 %v97
    %v151 = vpop.xlane.xlu0 %150
    %152 = vadd.xlane.f32.xlu0 %v98
    %v153 = vpop.xlane.xlu0 %152
    %154 = vadd.xlane.f32.xlu0 %v99
    %v155 = vpop.xlane.xlu0 %154
    %156 = vadd.xlane.f32.xlu0 %v100
    %v157 = vpop.xlane.xlu0 %156
    %158 = vadd.xlane.f32.xlu0 %v101
    %v159 = vpop.xlane.xlu0 %158
    %160 = vadd.xlane.f32.xlu0 %v102
    %v161 = vpop.xlane.xlu0 %160
    %162 = vadd.xlane.f32.xlu0 %v103
    %v163 = vpop.xlane.xlu0 %162
    %164 = vadd.xlane.f32.xlu0 %v104
    %v165 = vpop.xlane.xlu0 %164
    %166 = vadd.xlane.f32.xlu0 %v105
    %v167 = vpop.xlane.xlu0 %166
    %168 = vadd.xlane.f32.xlu0 %v106
    %v169 = vpop.xlane.xlu0 %168
    %170 = vadd.xlane.f32.xlu0 %v107
    %v171 = vpop.xlane.xlu0 %170
    %v172 = vrsqrt.pop %v109
    %v173 = vmul.f32 %v109, %v172
    %vm174 = vcmp.eq.f32.partialorder %v109, inf
    %v175 = vsel %vm174, %v109, %v173
    %vm176 = vcmp.eq.f32.partialorder %v109, 0.0
    %v177 = vand.u32 %v109, 2147483648
    %v178 = vsel %vm176, %v177, %v175
    %v179 = vrsqrt.pop %v111
    %v180 = vmul.f32 %v111, %v179
    %vm181 = vcmp.eq.f32.partialorder %v111, inf
    %v182 = vsel %vm181, %v111, %v180
    %vm183 = vcmp.eq.f32.partialorder %v111, 0.0
    %v184 = vand.u32 %v111, 2147483648
    %v185 = vsel %vm183, %v184, %v182
    %v186 = vrsqrt.pop %v113
    %v187 = vmul.f32 %v113, %v186
    %vm188 = vcmp.eq.f32.partialorder %v113, inf
    %v189 = vsel %vm188, %v113, %v187
    %vm190 = vcmp.eq.f32.partialorder %v113, 0.0
    %v191 = vand.u32 %v113, 2147483648
    %v192 = vsel %vm190, %v191, %v189
    %v193 = vrsqrt.pop %v115
    %v194 = vmul.f32 %v115, %v193
    %vm195 = vcmp.eq.f32.partialorder %v115, inf
    %v196 = vsel %vm195, %v115, %v194
    %vm197 = vcmp.eq.f32.partialorder %v115, 0.0
    %v198 = vand.u32 %v115, 2147483648
    %v199 = vsel %vm197, %v198, %v196
    %v200 = vrsqrt.pop %v117
    %v201 = vmul.f32 %v117, %v200
    %vm202 = vcmp.eq.f32.partialorder %v117, inf
    %v203 = vsel %vm202, %v117, %v201
    %vm204 = vcmp.eq.f32.partialorder %v117, 0.0
    %v205 = vand.u32 %v117, 2147483648
    %v206 = vsel %vm204, %v205, %v203
    %v207 = vrsqrt.pop %v119
    %v208 = vmul.f32 %v119, %v207
    %vm209 = vcmp.eq.f32.partialorder %v119, inf
    %v210 = vsel %vm209, %v119, %v208
    %vm211 = vcmp.eq.f32.partialorder %v119, 0.0
    %v212 = vand.u32 %v119, 2147483648
    %v213 = vsel %vm211, %v212, %v210
    %v214 = vrsqrt.pop %v121
    %v215 = vmul.f32 %v121, %v214
    %vm216 = vcmp.eq.f32.partialorder %v121, inf
    %v217 = vsel %vm216, %v121, %v215
    %vm218 = vcmp.eq.f32.partialorder %v121, 0.0
    %v219 = vand.u32 %v121, 2147483648
    %v220 = vsel %vm218, %v219, %v217
    %v221 = vrsqrt.pop %v123
    %v222 = vmul.f32 %v123, %v221
    %vm223 = vcmp.eq.f32.partialorder %v123, inf
    %v224 = vsel %vm223, %v123, %v222
    %vm225 = vcmp.eq.f32.partialorder %v123, 0.0
    %v226 = vand.u32 %v123, 2147483648
    %v227 = vsel %vm225, %v226, %v224
    %v228 = vrsqrt.pop %v125
    %v229 = vmul.f32 %v125, %v228
    %vm230 = vcmp.eq.f32.partialorder %v125, inf
    %v231 = vsel %vm230, %v125, %v229
    %vm232 = vcmp.eq.f32.partialorder %v125, 0.0
    %v233 = vand.u32 %v125, 2147483648
    %v234 = vsel %vm232, %v233, %v231
    %v235 = vrsqrt.pop %v127
    %v236 = vmul.f32 %v127, %v235
    %vm237 = vcmp.eq.f32.partialorder %v127, inf
    %v238 = vsel %vm237, %v127, %v236
    %vm239 = vcmp.eq.f32.partialorder %v127, 0.0
    %v240 = vand.u32 %v127, 2147483648
    %v241 = vsel %vm239, %v240, %v238
    %v242 = vrsqrt.pop %v129
    %v243 = vmul.f32 %v129, %v242
    %vm244 = vcmp.eq.f32.partialorder %v129, inf
    %v245 = vsel %vm244, %v129, %v243
    %vm246 = vcmp.eq.f32.partialorder %v129, 0.0
    %v247 = vand.u32 %v129, 2147483648
    %v248 = vsel %vm246, %v247, %v245
    %v249 = vrsqrt.pop %v131
    %v250 = vmul.f32 %v131, %v249
    %vm251 = vcmp.eq.f32.partialorder %v131, inf
    %v252 = vsel %vm251, %v131, %v250
    %vm253 = vcmp.eq.f32.partialorder %v131, 0.0
    %v254 = vand.u32 %v131, 2147483648
    %v255 = vsel %vm253, %v254, %v252
    %v256 = vrsqrt.pop %v133
    %v257 = vmul.f32 %v133, %v256
    %vm258 = vcmp.eq.f32.partialorder %v133, inf
    %v259 = vsel %vm258, %v133, %v257
    %vm260 = vcmp.eq.f32.partialorder %v133, 0.0
    %v261 = vand.u32 %v133, 2147483648
    %v262 = vsel %vm260, %v261, %v259
    %v263 = vrsqrt.pop %v135
    %v264 = vmul.f32 %v135, %v263
    %vm265 = vcmp.eq.f32.partialorder %v135, inf
    %v266 = vsel %vm265, %v135, %v264
    %vm267 = vcmp.eq.f32.partialorder %v135, 0.0
    %v268 = vand.u32 %v135, 2147483648
    %v269 = vsel %vm267, %v268, %v266
    %v270 = vrsqrt.pop %v137
    %v271 = vmul.f32 %v137, %v270
    %vm272 = vcmp.eq.f32.partialorder %v137, inf
    %v273 = vsel %vm272, %v137, %v271
    %vm274 = vcmp.eq.f32.partialorder %v137, 0.0
    %v275 = vand.u32 %v137, 2147483648
    %v276 = vsel %vm274, %v275, %v273
    %v277 = vrsqrt.pop %v139
    %v278 = vmul.f32 %v139, %v277
    %vm279 = vcmp.eq.f32.partialorder %v139, inf
    %v280 = vsel %vm279, %v139, %v278
    %vm281 = vcmp.eq.f32.partialorder %v139, 0.0
    %v282 = vand.u32 %v139, 2147483648
    %v283 = vsel %vm281, %v282, %v280
    %v284 = vrsqrt.pop %v141
    %v285 = vmul.f32 %v141, %v284
    %vm286 = vcmp.eq.f32.partialorder %v141, inf
    %v287 = vsel %vm286, %v141, %v285
    %vm288 = vcmp.eq.f32.partialorder %v141, 0.0
    %v289 = vand.u32 %v141, 2147483648
    %v290 = vsel %vm288, %v289, %v287
    %v291 = vrsqrt.pop %v143
    %v292 = vmul.f32 %v143, %v291
    %vm293 = vcmp.eq.f32.partialorder %v143, inf
    %v294 = vsel %vm293, %v143, %v292
    %vm295 = vcmp.eq.f32.partialorder %v143, 0.0
    %v296 = vand.u32 %v143, 2147483648
    %v297 = vsel %vm295, %v296, %v294
    %v298 = vrsqrt.pop %v145
    %v299 = vmul.f32 %v145, %v298
    %vm300 = vcmp.eq.f32.partialorder %v145, inf
    %v301 = vsel %vm300, %v145, %v299
    %vm302 = vcmp.eq.f32.partialorder %v145, 0.0
    %v303 = vand.u32 %v145, 2147483648
    %v304 = vsel %vm302, %v303, %v301
    %v305 = vrsqrt.pop %v147
    %v306 = vmul.f32 %v147, %v305
    %vm307 = vcmp.eq.f32.partialorder %v147, inf
    %v308 = vsel %vm307, %v147, %v306
    %vm309 = vcmp.eq.f32.partialorder %v147, 0.0
    %v310 = vand.u32 %v147, 2147483648
    %v311 = vsel %vm309, %v310, %v308
    %v312 = vrsqrt.pop %v149
    %v313 = vmul.f32 %v149, %v312
    %vm314 = vcmp.eq.f32.partialorder %v149, inf
    %v315 = vsel %vm314, %v149, %v313
    %vm316 = vcmp.eq.f32.partialorder %v149, 0.0
    %v317 = vand.u32 %v149, 2147483648
    %v318 = vsel %vm316, %v317, %v315
    %v319 = vrsqrt.pop %v151
    %v320 = vmul.f32 %v151, %v319
    %vm321 = vcmp.eq.f32.partialorder %v151, inf
    %v322 = vsel %vm321, %v151, %v320
    %vm323 = vcmp.eq.f32.partialorder %v151, 0.0
    %v324 = vand.u32 %v151, 2147483648
    %v325 = vsel %vm323, %v324, %v322
    %v326 = vrsqrt.pop %v153
    %v327 = vmul.f32 %v153, %v326
    %vm328 = vcmp.eq.f32.partialorder %v153, inf
    %v329 = vsel %vm328, %v153, %v327
    %vm330 = vcmp.eq.f32.partialorder %v153, 0.0
    %v331 = vand.u32 %v153, 2147483648
    %v332 = vsel %vm330, %v331, %v329
    %v333 = vrsqrt.pop %v155
    %v334 = vmul.f32 %v155, %v333
    %vm335 = vcmp.eq.f32.partialorder %v155, inf
    %v336 = vsel %vm335, %v155, %v334
    %vm337 = vcmp.eq.f32.partialorder %v155, 0.0
    %v338 = vand.u32 %v155, 2147483648
    %v339 = vsel %vm337, %v338, %v336
    %v340 = vrsqrt.pop %v157
    %v341 = vmul.f32 %v157, %v340
    %vm342 = vcmp.eq.f32.partialorder %v157, inf
    %v343 = vsel %vm342, %v157, %v341
    %vm344 = vcmp.eq.f32.partialorder %v157, 0.0
    %v345 = vand.u32 %v157, 2147483648
    %v346 = vsel %vm344, %v345, %v343
    %v347 = vrsqrt.pop %v159
    %v348 = vmul.f32 %v159, %v347
    %vm349 = vcmp.eq.f32.partialorder %v159, inf
    %v350 = vsel %vm349, %v159, %v348
    %vm351 = vcmp.eq.f32.partialorder %v159, 0.0
    %v352 = vand.u32 %v159, 2147483648
    %v353 = vsel %vm351, %v352, %v350
    %v354 = vrsqrt.pop %v161
    %v355 = vmul.f32 %v161, %v354
    %vm356 = vcmp.eq.f32.partialorder %v161, inf
    %v357 = vsel %vm356, %v161, %v355
    %vm358 = vcmp.eq.f32.partialorder %v161, 0.0
    %v359 = vand.u32 %v161, 2147483648
    %v360 = vsel %vm358, %v359, %v357
    %v361 = vrsqrt.pop %v163
    %v362 = vmul.f32 %v163, %v361
    %vm363 = vcmp.eq.f32.partialorder %v163, inf
    %v364 = vsel %vm363, %v163, %v362
    %vm365 = vcmp.eq.f32.partialorder %v163, 0.0
    %v366 = vand.u32 %v163, 2147483648
    %v367 = vsel %vm365, %v366, %v364
    %v368 = vrsqrt.pop %v165
    %v369 = vmul.f32 %v165, %v368
    %vm370 = vcmp.eq.f32.partialorder %v165, inf
    %v371 = vsel %vm370, %v165, %v369
    %vm372 = vcmp.eq.f32.partialorder %v165, 0.0
    %v373 = vand.u32 %v165, 2147483648
    %v374 = vsel %vm372, %v373, %v371
    %v375 = vrsqrt.pop %v167
    %v376 = vmul.f32 %v167, %v375
    %vm377 = vcmp.eq.f32.partialorder %v167, inf
    %v378 = vsel %vm377, %v167, %v376
    %vm379 = vcmp.eq.f32.partialorder %v167, 0.0
    %v380 = vand.u32 %v167, 2147483648
    %v381 = vsel %vm379, %v380, %v378
    %v382 = vrsqrt.pop %v169
    %v383 = vmul.f32 %v169, %v382
    %vm384 = vcmp.eq.f32.partialorder %v169, inf
    %v385 = vsel %vm384, %v169, %v383
    %vm386 = vcmp.eq.f32.partialorder %v169, 0.0
    %v387 = vand.u32 %v169, 2147483648
    %v388 = vsel %vm386, %v387, %v385
    %v389 = vrsqrt.pop %v171
    %v390 = vmul.f32 %v171, %v389
    %vm391 = vcmp.eq.f32.partialorder %v171, inf
    %v392 = vsel %vm391, %v171, %v390
    %vm393 = vcmp.eq.f32.partialorder %v171, 0.0
    %v394 = vand.u32 %v171, 2147483648
    %v395 = vsel %vm393, %v394, %v392
    %v396 = vmax.f32 %v178, 1e-12
    %v397 = vmax.f32 %v185, 1e-12
    %v398 = vmax.f32 %v192, 1e-12
    %v399 = vmax.f32 %v199, 1e-12
    %v400 = vmax.f32 %v206, 1e-12
    %v401 = vmax.f32 %v213, 1e-12
    %v402 = vmax.f32 %v220, 1e-12
    %v403 = vmax.f32 %v227, 1e-12
    %v404 = vmax.f32 %v234, 1e-12
    %v405 = vmax.f32 %v241, 1e-12
    %v406 = vmax.f32 %v248, 1e-12
    %v407 = vmax.f32 %v255, 1e-12
    %v408 = vmax.f32 %v262, 1e-12
    %v409 = vmax.f32 %v269, 1e-12
    %v410 = vmax.f32 %v276, 1e-12
    %v411 = vmax.f32 %v283, 1e-12
    %v412 = vmax.f32 %v290, 1e-12
    %v413 = vmax.f32 %v297, 1e-12
    %v414 = vmax.f32 %v304, 1e-12
    %v415 = vmax.f32 %v311, 1e-12
    %v416 = vmax.f32 %v318, 1e-12
    %v417 = vmax.f32 %v325, 1e-12
    %v418 = vmax.f32 %v332, 1e-12
    %v419 = vmax.f32 %v339, 1e-12
    %v420 = vmax.f32 %v346, 1e-12
    %v421 = vmax.f32 %v353, 1e-12
    %v422 = vmax.f32 %v360, 1e-12
    %v423 = vmax.f32 %v367, 1e-12
    %v424 = vmax.f32 %v374, 1e-12
    %v425 = vmax.f32 %v381, 1e-12
    %v426 = vmax.f32 %v388, 1e-12
    %v427 = vmax.f32 %v395, 1e-12
    %v428 = vrcp.pop %v396
    %v429 = vrcp.pop %v397
    %v430 = vrcp.pop %v398
    %v431 = vrcp.pop %v399
    %v432 = vrcp.pop %v400
    %v433 = vrcp.pop %v401
    %v434 = vrcp.pop %v402
    %v435 = vrcp.pop %v403
    %v436 = vrcp.pop %v404
    %v437 = vrcp.pop %v405
    %v438 = vrcp.pop %v406
    %v439 = vrcp.pop %v407
    %v440 = vrcp.pop %v408
    %v441 = vrcp.pop %v409
    %v442 = vrcp.pop %v410
    %v443 = vrcp.pop %v411
    %v444 = vrcp.pop %v412
    %v445 = vrcp.pop %v413
    %v446 = vrcp.pop %v414
    %v447 = vrcp.pop %v415
    %v448 = vrcp.pop %v416
    %v449 = vrcp.pop %v417
    %v450 = vrcp.pop %v418
    %v451 = vrcp.pop %v419
    %v452 = vrcp.pop %v420
    %v453 = vrcp.pop %v421
    %v454 = vrcp.pop %v422
    %v455 = vrcp.pop %v423
    %v456 = vrcp.pop %v424
    %v457 = vrcp.pop %v425
    %v458 = vrcp.pop %v426
    %v459 = vrcp.pop %v427
    %v460 = vmul.f32 %v44, %v428
    %v461 = vmul.f32 %v45, %v429
    %v462 = vmul.f32 %v46, %v430
    %v463 = vmul.f32 %v47, %v431
    %v464 = vmul.f32 %v48, %v432
    %v465 = vmul.f32 %v49, %v433
    %v466 = vmul.f32 %v50, %v434
    %v467 = vmul.f32 %v51, %v435
    %v468 = vmul.f32 %v52, %v436
    %v469 = vmul.f32 %v53, %v437
    %v470 = vmul.f32 %v54, %v438
    %v471 = vmul.f32 %v55, %v439
    %v472 = vmul.f32 %v56, %v440
    %v473 = vmul.f32 %v57, %v441
    %v474 = vmul.f32 %v58, %v442
    %v475 = vmul.f32 %v59, %v443
    %v476 = vmul.f32 %v60, %v444
    %v477 = vmul.f32 %v61, %v445
    %v478 = vmul.f32 %v62, %v446
    %v479 = vmul.f32 %v63, %v447
    %v480 = vmul.f32 %v64, %v448
    %v481 = vmul.f32 %v65, %v449
    %v482 = vmul.f32 %v66, %v450
    %v483 = vmul.f32 %v67, %v451
    %v484 = vmul.f32 %v68, %v452
    %v485 = vmul.f32 %v69, %v453
    %v486 = vmul.f32 %v70, %v454
    %v487 = vmul.f32 %v71, %v455
    %v488 = vmul.f32 %v72, %v456
    %v489 = vmul.f32 %v73, %v457
    %v490 = vmul.f32 %v74, %v458
    %v491 = vmul.f32 %v75, %v459
    %v492 = vpack.c.bf16 %v461, %v460
    %v493 = vpack.c.bf16 %v463, %v462
    %v494 = vpack.c.bf16 %v465, %v464
    %v495 = vpack.c.bf16 %v467, %v466
    %v496 = vpack.c.bf16 %v469, %v468
    %v497 = vpack.c.bf16 %v471, %v470
    %v498 = vpack.c.bf16 %v473, %v472
    %v499 = vpack.c.bf16 %v475, %v474
    %v500 = vpack.c.bf16 %v477, %v476
    %v501 = vpack.c.bf16 %v479, %v478
    %v502 = vpack.c.bf16 %v481, %v480
    %v503 = vpack.c.bf16 %v483, %v482
    %v504 = vpack.c.bf16 %v485, %v484
    %v505 = vpack.c.bf16 %v487, %v486
    %v506 = vpack.c.bf16 %v489, %v488
    %v507 = vpack.c.bf16 %v491, %v490
    %v508 = vld [vmem:[#allocation5] sm:$0xff]
    %v509 = vld [vmem:[#allocation5 + $0x8] sm:$0xf]
    %v510 = vld [vmem:[#allocation5 + $0xc] sm:$0xff]
    %v511 = vld [vmem:[#allocation5 + $0x14] sm:$0xf]
    %v512 = vld [vmem:[#allocation5 + $0x18] sm:$0xff]
    %v513 = vld [vmem:[#allocation5 + $0x20] sm:$0xf]
    %v514 = vld [vmem:[#allocation5 + $0x24] sm:$0xff]
    %v515 = vld [vmem:[#allocation5 + $0x2c] sm:$0xf]
    %v516 = vld [vmem:[#allocation5 + $0x30] sm:$0xff]
    %v517 = vld [vmem:[#allocation5 + $0x38] sm:$0xf]
    %v518 = vld [vmem:[#allocation5 + $0x3c] sm:$0xff]
    %v519 = vld [vmem:[#allocation5 + $0x44] sm:$0xf]
    %v520 = vld [vmem:[#allocation5 + $0x48] sm:$0xff]
    %v521 = vld [vmem:[#allocation5 + $0x50] sm:$0xf]
    %v522 = vld [vmem:[#allocation5 + $0x54] sm:$0xff]
    %v523 = vld [vmem:[#allocation5 + $0x5c] sm:$0xf]
    %v524 = vld [vmem:[#allocation5 + $0x60] sm:$0xff]
    %v525 = vld [vmem:[#allocation5 + $0x68] sm:$0xf]
    %v526 = vld [vmem:[#allocation5 + $0x6c] sm:$0xff]
    %v527 = vld [vmem:[#allocation5 + $0x74] sm:$0xf]
    %v528 = vld [vmem:[#allocation5 + $0x78] sm:$0xff]
    %v529 = vld [vmem:[#allocation5 + $0x80] sm:$0xf]
    %v530 = vld [vmem:[#allocation5 + $0x84] sm:$0xff]
    %v531 = vld [vmem:[#allocation5 + $0x8c] sm:$0xf]
    %v532 = vld [vmem:[#allocation5 + $0x90] sm:$0xff]
    %v533 = vld [vmem:[#allocation5 + $0x98] sm:$0xf]
    %v534 = vld [vmem:[#allocation5 + $0x9c] sm:$0xff]
    %v535 = vld [vmem:[#allocation5 + $0xa4] sm:$0xf]
    %v536 = vld [vmem:[#allocation5 + $0xa8] sm:$0xff]
    %v537 = vld [vmem:[#allocation5 + $0xb0] sm:$0xf]
    %v538 = vld [vmem:[#allocation5 + $0xb4] sm:$0xff]
    %v539 = vld [vmem:[#allocation5 + $0xbc] sm:$0xf]
    %v572 = vunpack.c.l.b16 %v508
    %v573 = vunpack.c.h.b16 %v508
    %v574 = vunpack.c.l.b16 %v509
    %v575 = vunpack.c.l.b16 %v510
    %v576 = vunpack.c.h.b16 %v510
    %v577 = vunpack.c.l.b16 %v511
    %v578 = vunpack.c.l.b16 %v512
    %v579 = vunpack.c.h.b16 %v512
    %v580 = vunpack.c.l.b16 %v513
    %v581 = vunpack.c.l.b16 %v514
    %v582 = vunpack.c.h.b16 %v514
    %v583 = vunpack.c.l.b16 %v515
    %v584 = vunpack.c.l.b16 %v516
    %v585 = vunpack.c.h.b16 %v516
    %v586 = vunpack.c.l.b16 %v517
    %v587 = vunpack.c.l.b16 %v518
    %v588 = vunpack.c.h.b16 %v518
    %v589 = vunpack.c.l.b16 %v519
    %v590 = vunpack.c.l.b16 %v520
    %v591 = vunpack.c.h.b16 %v520
    %v592 = vunpack.c.l.b16 %v521
    %v593 = vunpack.c.l.b16 %v522
    %v594 = vunpack.c.h.b16 %v522
    %v595 = vunpack.c.l.b16 %v523
    %v596 = vunpack.c.l.b16 %v524
    %v597 = vunpack.c.h.b16 %v524
    %v598 = vunpack.c.l.b16 %v525
    %v599 = vunpack.c.l.b16 %v526
    %v600 = vunpack.c.h.b16 %v526
    %v601 = vunpack.c.l.b16 %v527
    %v602 = vunpack.c.l.b16 %v528
    %v603 = vunpack.c.h.b16 %v528
    %v604 = vunpack.c.l.b16 %v529
    %v605 = vunpack.c.l.b16 %v530
    %v606 = vunpack.c.h.b16 %v530
    %v607 = vunpack.c.l.b16 %v531
    %v608 = vunpack.c.l.b16 %v532
    %v609 = vunpack.c.h.b16 %v532
    %v610 = vunpack.c.l.b16 %v533
    %v611 = vunpack.c.l.b16 %v534
    %v612 = vunpack.c.h.b16 %v534
    %v613 = vunpack.c.l.b16 %v535
    %v614 = vunpack.c.l.b16 %v536
    %v615 = vunpack.c.h.b16 %v536
    %v616 = vunpack.c.l.b16 %v537
    %v617 = vunpack.c.l.b16 %v538
    %v618 = vunpack.c.h.b16 %v538
    %v619 = vunpack.c.l.b16 %v539
    %v620 = vpack.c.b16 %v575, %v572
    %v621 = vpack.c.b16 %v576, %v573
    %v622 = vpack.c.b16 %v577, %v574
    %v623 = vpack.c.b16 %v581, %v578
    %v624 = vpack.c.b16 %v582, %v579
    %v625 = vpack.c.b16 %v583, %v580
    %v626 = vpack.c.b16 %v587, %v584
    %v627 = vpack.c.b16 %v588, %v585
    %v628 = vpack.c.b16 %v589, %v586
    %v629 = vpack.c.b16 %v593, %v590
    %v630 = vpack.c.b16 %v594, %v591
    %v631 = vpack.c.b16 %v595, %v592
    %v632 = vpack.c.b16 %v599, %v596
    %v633 = vpack.c.b16 %v600, %v597
    %v634 = vpack.c.b16 %v601, %v598
    %v635 = vpack.c.b16 %v605, %v602
    %v636 = vpack.c.b16 %v606, %v603
    %v637 = vpack.c.b16 %v607, %v604
    %v638 = vpack.c.b16 %v611, %v608
    %v639 = vpack.c.b16 %v612, %v609
    %v640 = vpack.c.b16 %v613, %v610
    %v641 = vpack.c.b16 %v617, %v614
    %v642 = vpack.c.b16 %v618, %v615
    %v643 = vpack.c.b16 %v619, %v616
    %668 = vmatprep.subr.bf16.mxu0 %v642
    %669 = vmatpush1.bf16.msra.mxu0 %v641
    %670 = vmatprep.subr.bf16.mxu0 %v639
    %671 = vmatpush1.bf16.msra.mxu0 %v638
    %672 = vmatprep.subr.bf16.mxu0 %v636
    %673 = vmatpush1.bf16.msra.mxu0 %v635
    %674 = vmatprep.subr.bf16.mxu0 %v633
    %675 = vmatpush1.bf16.msra.mxu0 %v632
    %676 = vmatprep.subr.bf16.mxu0 %v630
    %677 = vmatpush1.bf16.msra.mxu0 %v629
    %678 = vmatprep.subr.bf16.mxu0 %v627
    %679 = vmatpush1.bf16.msra.mxu0 %v626
    %680 = vmatprep.subr.bf16.mxu0 %v624
    %681 = vmatpush1.bf16.msra.mxu0 %v623
    %682 = vmatprep.subr.bf16.mxu0 %v621
    %683 = vmatpush1.bf16.msra.mxu0 %v620
    %684 = vmatprep.subr.bf16.mxu0 0
    %685 = vmatpush2.bf16.msra.mxu0 0
    %686 = vmatprep.subr.bf16.mxu0 0
    %687 = vmatpush2.bf16.msra.mxu0 0
    %688 = vmatprep.subr.bf16.mxu0 0
    %689 = vmatpush2.bf16.msra.mxu0 0
    %690 = vmatprep.subr.bf16.mxu0 0
    %691 = vmatpush2.bf16.msra.mxu0 0
    %692 = vmatprep.subr.bf16.mxu0 0
    %693 = vmatpush2.bf16.msra.mxu0 0
    %694 = vmatprep.subr.bf16.mxu0 0
    %695 = vmatpush2.bf16.msra.mxu0 0
    %696 = vmatprep.subr.bf16.mxu0 0
    %697 = vmatpush2.bf16.msra.mxu0 0
    %698 = vmatprep.subr.bf16.mxu0 0
    %699 = vmatpush2.bf16.msra.mxu0 0
    %700 = vmatprep.mubr.bf16.mxu0 0
    %701 = vmatmul.mubr.bf16.gmra.mxu0 %v492
    %v702 = vpop.f32.mrf.mxu0
    %v703 = vadd.f32 0.0, %v702
    %v704 = vpop.f32.mrf.mxu0
    %v705 = vadd.f32 0.0, %v704
    %v706 = vpop.f32.mrf.mxu0
    %v707 = vadd.f32 0.0, %v706
    %v708 = vpop.f32.mrf.mxu0
    %v709 = vadd.f32 0.0, %v708
    %710 = vmatprep.mubr.bf16.mxu0 0
    %711 = vmatmul.mubr.bf16.gmra.mxu0 %v493
    %v712 = vpop.f32.mrf.mxu0
    %v713 = vadd.f32 0.0, %v712
    %v714 = vpop.f32.mrf.mxu0
    %v715 = vadd.f32 0.0, %v714
    %v716 = vpop.f32.mrf.mxu0
    %v717 = vadd.f32 0.0, %v716
    %v718 = vpop.f32.mrf.mxu0
    %v719 = vadd.f32 0.0, %v718
    %720 = vmatprep.mubr.bf16.mxu0 0
    %721 = vmatmul.mubr.bf16.gmra.mxu0 %v494
    %v722 = vpop.f32.mrf.mxu0
    %v723 = vadd.f32 0.0, %v722
    %v724 = vpop.f32.mrf.mxu0
    %v725 = vadd.f32 0.0, %v724
    %v726 = vpop.f32.mrf.mxu0
    %v727 = vadd.f32 0.0, %v726
    %v728 = vpop.f32.mrf.mxu0
    %v729 = vadd.f32 0.0, %v728
    %730 = vmatprep.mubr.bf16.mxu0 0
    %731 = vmatmul.mubr.bf16.gmra.mxu0 %v495
    %v732 = vpop.f32.mrf.mxu0
    %v733 = vadd.f32 0.0, %v732
    %v734 = vpop.f32.mrf.mxu0
    %v735 = vadd.f32 0.0, %v734
    %v736 = vpop.f32.mrf.mxu0
    %v737 = vadd.f32 0.0, %v736
    %v738 = vpop.f32.mrf.mxu0
    %v739 = vadd.f32 0.0, %v738
    %740 = vmatprep.mubr.bf16.mxu0 0
    %741 = vmatmul.mubr.bf16.gmra.mxu0 %v496
    %v742 = vpop.f32.mrf.mxu0
    %v743 = vadd.f32 0.0, %v742
    %v744 = vpop.f32.mrf.mxu0
    %v745 = vadd.f32 0.0, %v744
    %v746 = vpop.f32.mrf.mxu0
    %v747 = vadd.f32 0.0, %v746
    %v748 = vpop.f32.mrf.mxu0
    %v749 = vadd.f32 0.0, %v748
    %750 = vmatprep.mubr.bf16.mxu0 0
    %751 = vmatmul.mubr.bf16.gmra.mxu0 %v497
    %v752 = vpop.f32.mrf.mxu0
    %v753 = vadd.f32 0.0, %v752
    %v754 = vpop.f32.mrf.mxu0
    %v755 = vadd.f32 0.0, %v754
    %v756 = vpop.f32.mrf.mxu0
    %v757 = vadd.f32 0.0, %v756
    %v758 = vpop.f32.mrf.mxu0
    %v759 = vadd.f32 0.0, %v758
    %760 = vmatprep.mubr.bf16.mxu0 0
    %761 = vmatmul.mubr.bf16.gmra.mxu0 %v498
    %v762 = vpop.f32.mrf.mxu0
    %v763 = vadd.f32 0.0, %v762
    %v764 = vpop.f32.mrf.mxu0
    %v765 = vadd.f32 0.0, %v764
    %v766 = vpop.f32.mrf.mxu0
    %v767 = vadd.f32 0.0, %v766
    %v768 = vpop.f32.mrf.mxu0
    %v769 = vadd.f32 0.0, %v768
    %770 = vmatprep.mubr.bf16.mxu0 0
    %771 = vmatmul.mubr.bf16.gmra.mxu0 %v499
    %v772 = vpop.f32.mrf.mxu0
    %v773 = vadd.f32 0.0, %v772
    %v774 = vpop.f32.mrf.mxu0
    %v775 = vadd.f32 0.0, %v774
    %v776 = vpop.f32.mrf.mxu0
    %v777 = vadd.f32 0.0, %v776
    %v778 = vpop.f32.mrf.mxu0
    %v779 = vadd.f32 0.0, %v778
    %780 = vmatprep.mubr.bf16.mxu0 0
    %781 = vmatmul.mubr.bf16.gmra.mxu0 %v500
    %v782 = vpop.f32.mrf.mxu0
    %v783 = vadd.f32 0.0, %v782
    %v784 = vpop.f32.mrf.mxu0
    %v785 = vadd.f32 0.0, %v784
    %v786 = vpop.f32.mrf.mxu0
    %v787 = vadd.f32 0.0, %v786
    %v788 = vpop.f32.mrf.mxu0
    %v789 = vadd.f32 0.0, %v788
    %790 = vmatprep.mubr.bf16.mxu0 0
    %791 = vmatmul.mubr.bf16.gmra.mxu0 %v501
    %v792 = vpop.f32.mrf.mxu0
    %v793 = vadd.f32 0.0, %v792
    %v794 = vpop.f32.mrf.mxu0
    %v795 = vadd.f32 0.0, %v794
    %v796 = vpop.f32.mrf.mxu0
    %v797 = vadd.f32 0.0, %v796
    %v798 = vpop.f32.mrf.mxu0
    %v799 = vadd.f32 0.0, %v798
    %800 = vmatprep.mubr.bf16.mxu0 0
    %801 = vmatmul.mubr.bf16.gmra.mxu0 %v502
    %v802 = vpop.f32.mrf.mxu0
    %v803 = vadd.f32 0.0, %v802
    %v804 = vpop.f32.mrf.mxu0
    %v805 = vadd.f32 0.0, %v804
    %v806 = vpop.f32.mrf.mxu0
    %v807 = vadd.f32 0.0, %v806
    %v808 = vpop.f32.mrf.mxu0
    %v809 = vadd.f32 0.0, %v808
    %810 = vmatprep.mubr.bf16.mxu0 0
    %811 = vmatmul.mubr.bf16.gmra.mxu0 %v503
    %v812 = vpop.f32.mrf.mxu0
    %v813 = vadd.f32 0.0, %v812
    %v814 = vpop.f32.mrf.mxu0
    %v815 = vadd.f32 0.0, %v814
    %v816 = vpop.f32.mrf.mxu0
    %v817 = vadd.f32 0.0, %v816
    %v818 = vpop.f32.mrf.mxu0
    %v819 = vadd.f32 0.0, %v818
    %820 = vmatprep.mubr.bf16.mxu0 0
    %821 = vmatmul.mubr.bf16.gmra.mxu0 %v504
    %v822 = vpop.f32.mrf.mxu0
    %v823 = vadd.f32 0.0, %v822
    %v824 = vpop.f32.mrf.mxu0
    %v825 = vadd.f32 0.0, %v824
    %v826 = vpop.f32.mrf.mxu0
    %v827 = vadd.f32 0.0, %v826
    %v828 = vpop.f32.mrf.mxu0
    %v829 = vadd.f32 0.0, %v828
    %830 = vmatprep.mubr.bf16.mxu0 0
    %831 = vmatmul.mubr.bf16.gmra.mxu0 %v505
    %v832 = vpop.f32.mrf.mxu0
    %v833 = vadd.f32 0.0, %v832
    %v834 = vpop.f32.mrf.mxu0
    %v835 = vadd.f32 0.0, %v834
    %v836 = vpop.f32.mrf.mxu0
    %v837 = vadd.f32 0.0, %v836
    %v838 = vpop.f32.mrf.mxu0
    %v839 = vadd.f32 0.0, %v838
    %840 = vmatprep.mubr.bf16.mxu0 0
    %841 = vmatmul.mubr.bf16.gmra.mxu0 %v506
    %v842 = vpop.f32.mrf.mxu0
    %v843 = vadd.f32 0.0, %v842
    %v844 = vpop.f32.mrf.mxu0
    %v845 = vadd.f32 0.0, %v844
    %v846 = vpop.f32.mrf.mxu0
    %v847 = vadd.f32 0.0, %v846
    %v848 = vpop.f32.mrf.mxu0
    %v849 = vadd.f32 0.0, %v848
    %850 = vmatprep.mubr.bf16.mxu0 0
    %851 = vmatmul.mubr.bf16.gmra.mxu0 %v507
    %v852 = vpop.f32.mrf.mxu0
    %v853 = vadd.f32 0.0, %v852
    %v854 = vpop.f32.mrf.mxu0
    %v855 = vadd.f32 0.0, %v854
    %v856 = vpop.f32.mrf.mxu0
    %v857 = vadd.f32 0.0, %v856
    %v858 = vpop.f32.mrf.mxu0
    %v859 = vadd.f32 0.0, %v858
    %860 = vdwg.mxu0
    %861 = vmatprep.subr.bf16.mxu0 0
    %862 = vmatpush1.bf16.msra.mxu0 %v643
    %863 = vmatprep.subr.bf16.mxu0 0
    %864 = vmatpush1.bf16.msra.mxu0 %v640
    %865 = vmatprep.subr.bf16.mxu0 0
    %866 = vmatpush1.bf16.msra.mxu0 %v637
    %867 = vmatprep.subr.bf16.mxu0 0
    %868 = vmatpush1.bf16.msra.mxu0 %v634
    %869 = vmatprep.subr.bf16.mxu0 0
    %870 = vmatpush1.bf16.msra.mxu0 %v631
    %871 = vmatprep.subr.bf16.mxu0 0
    %872 = vmatpush1.bf16.msra.mxu0 %v628
    %873 = vmatprep.subr.bf16.mxu0 0
    %874 = vmatpush1.bf16.msra.mxu0 %v625
    %875 = vmatprep.subr.bf16.mxu0 0
    %876 = vmatpush1.bf16.msra.mxu0 %v622
    %877 = vmatprep.subr.bf16.mxu0 0
    %878 = vmatpush2.bf16.msra.mxu0 0
    %879 = vmatprep.subr.bf16.mxu0 0
    %880 = vmatpush2.bf16.msra.mxu0 0
    %881 = vmatprep.subr.bf16.mxu0 0
    %882 = vmatpush2.bf16.msra.mxu0 0
    %883 = vmatprep.subr.bf16.mxu0 0
    %884 = vmatpush2.bf16.msra.mxu0 0
    %885 = vmatprep.subr.bf16.mxu0 0
    %886 = vmatpush2.bf16.msra.mxu0 0
    %887 = vmatprep.subr.bf16.mxu0 0
    %888 = vmatpush2.bf16.msra.mxu0 0
    %889 = vmatprep.subr.bf16.mxu0 0
    %890 = vmatpush2.bf16.msra.mxu0 0
    %891 = vmatprep.subr.bf16.mxu0 0
    %892 = vmatpush2.bf16.msra.mxu0 0
    %893 = vmatprep.mubr.bf16.mxu0 0
    %894 = vmatmul.mubr.bf16.gmra.mxu0 %v492
    %v895 = vpop.f32.mrf.mxu0
    %v896 = vadd.f32 0.0, %v895
    %v897 = vpop.f32.mrf.mxu0
    %v898 = vpop.f32.mrf.mxu0
    %v899 = vadd.f32 0.0, %v898
    %v900 = vpop.f32.mrf.mxu0
    %901 = vmatprep.mubr.bf16.mxu0 0
    %902 = vmatmul.mubr.bf16.gmra.mxu0 %v493
    %v903 = vpop.f32.mrf.mxu0
    %v904 = vadd.f32 0.0, %v903
    %v905 = vpop.f32.mrf.mxu0
    %v906 = vpop.f32.mrf.mxu0
    %v907 = vadd.f32 0.0, %v906
    %v908 = vpop.f32.mrf.mxu0
    %909 = vmatprep.mubr.bf16.mxu0 0
    %910 = vmatmul.mubr.bf16.gmra.mxu0 %v494
    %v911 = vpop.f32.mrf.mxu0
    %v912 = vadd.f32 0.0, %v911
    %v913 = vpop.f32.mrf.mxu0
    %v914 = vpop.f32.mrf.mxu0
    %v915 = vadd.f32 0.0, %v914
    %v916 = vpop.f32.mrf.mxu0
    %917 = vmatprep.mubr.bf16.mxu0 0
    %918 = vmatmul.mubr.bf16.gmra.mxu0 %v495
    %v919 = vpop.f32.mrf.mxu0
    %v920 = vadd.f32 0.0, %v919
    %v921 = vpop.f32.mrf.mxu0
    %v922 = vpop.f32.mrf.mxu0
    %v923 = vadd.f32 0.0, %v922
    %v924 = vpop.f32.mrf.mxu0
    %925 = vmatprep.mubr.bf16.mxu0 0
    %926 = vmatmul.mubr.bf16.gmra.mxu0 %v496
    %v927 = vpop.f32.mrf.mxu0
    %v928 = vadd.f32 0.0, %v927
    %v929 = vpop.f32.mrf.mxu0
    %v930 = vpop.f32.mrf.mxu0
    %v931 = vadd.f32 0.0, %v930
    %v932 = vpop.f32.mrf.mxu0
    %933 = vmatprep.mubr.bf16.mxu0 0
    %934 = vmatmul.mubr.bf16.gmra.mxu0 %v497
    %v935 = vpop.f32.mrf.mxu0
    %v936 = vadd.f32 0.0, %v935
    %v937 = vpop.f32.mrf.mxu0
    %v938 = vpop.f32.mrf.mxu0
    %v939 = vadd.f32 0.0, %v938
    %v940 = vpop.f32.mrf.mxu0
    %941 = vmatprep.mubr.bf16.mxu0 0
    %942 = vmatmul.mubr.bf16.gmra.mxu0 %v498
    %v943 = vpop.f32.mrf.mxu0
    %v944 = vadd.f32 0.0, %v943
    %v945 = vpop.f32.mrf.mxu0
    %v946 = vpop.f32.mrf.mxu0
    %v947 = vadd.f32 0.0, %v946
    %v948 = vpop.f32.mrf.mxu0
    %949 = vmatprep.mubr.bf16.mxu0 0
    %950 = vmatmul.mubr.bf16.gmra.mxu0 %v499
    %v951 = vpop.f32.mrf.mxu0
    %v952 = vadd.f32 0.0, %v951
    %v953 = vpop.f32.mrf.mxu0
    %v954 = vpop.f32.mrf.mxu0
    %v955 = vadd.f32 0.0, %v954
    %v956 = vpop.f32.mrf.mxu0
    %957 = vmatprep.mubr.bf16.mxu0 0
    %958 = vmatmul.mubr.bf16.gmra.mxu0 %v500
    %v959 = vpop.f32.mrf.mxu0
    %v960 = vadd.f32 0.0, %v959
    %v961 = vpop.f32.mrf.mxu0
    %v962 = vpop.f32.mrf.mxu0
    %v963 = vadd.f32 0.0, %v962
    %v964 = vpop.f32.mrf.mxu0
    %965 = vmatprep.mubr.bf16.mxu0 0
    %966 = vmatmul.mubr.bf16.gmra.mxu0 %v501
    %v967 = vpop.f32.mrf.mxu0
    %v968 = vadd.f32 0.0, %v967
    %v969 = vpop.f32.mrf.mxu0
    %v970 = vpop.f32.mrf.mxu0
    %v971 = vadd.f32 0.0, %v970
    %v972 = vpop.f32.mrf.mxu0
    %973 = vmatprep.mubr.bf16.mxu0 0
    %974 = vmatmul.mubr.bf16.gmra.mxu0 %v502
    %v975 = vpop.f32.mrf.mxu0
    %v976 = vadd.f32 0.0, %v975
    %v977 = vpop.f32.mrf.mxu0
    %v978 = vpop.f32.mrf.mxu0
    %v979 = vadd.f32 0.0, %v978
    %v980 = vpop.f32.mrf.mxu0
    %981 = vmatprep.mubr.bf16.mxu0 0
    %982 = vmatmul.mubr.bf16.gmra.mxu0 %v503
    %v983 = vpop.f32.mrf.mxu0
    %v984 = vadd.f32 0.0, %v983
    %v985 = vpop.f32.mrf.mxu0
    %v986 = vpop.f32.mrf.mxu0
    %v987 = vadd.f32 0.0, %v986
    %v988 = vpop.f32.mrf.mxu0
    %989 = vmatprep.mubr.bf16.mxu0 0
    %990 = vmatmul.mubr.bf16.gmra.mxu0 %v504
    %v991 = vpop.f32.mrf.mxu0
    %v992 = vadd.f32 0.0, %v991
    %v993 = vpop.f32.mrf.mxu0
    %v994 = vpop.f32.mrf.mxu0
    %v995 = vadd.f32 0.0, %v994
    %v996 = vpop.f32.mrf.mxu0
    %997 = vmatprep.mubr.bf16.mxu0 0
    %998 = vmatmul.mubr.bf16.gmra.mxu0 %v505
    %v999 = vpop.f32.mrf.mxu0
    %v1000 = vadd.f32 0.0, %v999
    %v1001 = vpop.f32.mrf.mxu0
    %v1002 = vpop.f32.mrf.mxu0
    %v1003 = vadd.f32 0.0, %v1002
    %v1004 = vpop.f32.mrf.mxu0
    %1005 = vmatprep.mubr.bf16.mxu0 0
    %1006 = vmatmul.mubr.bf16.gmra.mxu0 %v506
    %v1007 = vpop.f32.mrf.mxu0
    %v1008 = vadd.f32 0.0, %v1007
    %v1009 = vpop.f32.mrf.mxu0
    %v1010 = vpop.f32.mrf.mxu0
    %v1011 = vadd.f32 0.0, %v1010
    %v1012 = vpop.f32.mrf.mxu0
    %1013 = vmatprep.mubr.bf16.mxu0 0
    %1014 = vmatmul.mubr.bf16.gmra.mxu0 %v507
    %v1015 = vpop.f32.mrf.mxu0
    %v1016 = vadd.f32 0.0, %v1015
    %v1017 = vpop.f32.mrf.mxu0
    %v1018 = vpop.f32.mrf.mxu0
    %v1019 = vadd.f32 0.0, %v1018
    %v1020 = vpop.f32.mrf.mxu0
    %1021 = vdwg.mxu0
    %v1022 = vpack.c.bf16 %v707, %v703
    %v1023 = vpack.c.bf16 %v709, %v705
    %v1024 = vpack.c.bf16 %v717, %v713
    %v1025 = vpack.c.bf16 %v719, %v715
    %v1026 = vpack.c.bf16 %v727, %v723
    %v1027 = vpack.c.bf16 %v729, %v725
    %v1028 = vpack.c.bf16 %v737, %v733
    %v1029 = vpack.c.bf16 %v739, %v735
    %v1030 = vpack.c.bf16 %v747, %v743
    %v1031 = vpack.c.bf16 %v749, %v745
    %v1032 = vpack.c.bf16 %v757, %v753
    %v1033 = vpack.c.bf16 %v759, %v755
    %v1034 = vpack.c.bf16 %v767, %v763
    %v1035 = vpack.c.bf16 %v769, %v765
    %v1036 = vpack.c.bf16 %v777, %v773
    %v1037 = vpack.c.bf16 %v779, %v775
    %v1038 = vpack.c.bf16 %v787, %v783
    %v1039 = vpack.c.bf16 %v789, %v785
    %v1040 = vpack.c.bf16 %v797, %v793
    %v1041 = vpack.c.bf16 %v799, %v795
    %v1042 = vpack.c.bf16 %v807, %v803
    %v1043 = vpack.c.bf16 %v809, %v805
    %v1044 = vpack.c.bf16 %v817, %v813
    %v1045 = vpack.c.bf16 %v819, %v815
    %v1046 = vpack.c.bf16 %v827, %v823
    %v1047 = vpack.c.bf16 %v829, %v825
    %v1048 = vpack.c.bf16 %v837, %v833
    %v1049 = vpack.c.bf16 %v839, %v835
    %v1050 = vpack.c.bf16 %v847, %v843
    %v1051 = vpack.c.bf16 %v849, %v845
    %v1052 = vpack.c.bf16 %v857, %v853
    %v1053 = vpack.c.bf16 %v859, %v855
    %v1086 = vunpack.c.l.b16 %v1022
    %v1087 = vunpack.c.l.b16 %v1023
    %v1088 = vunpack.c.h.b16 %v1022
    %v1089 = vunpack.c.h.b16 %v1023
    %v1090 = vunpack.c.l.b16 %v1024
    %v1091 = vunpack.c.l.b16 %v1025
    %v1092 = vunpack.c.h.b16 %v1024
    %v1093 = vunpack.c.h.b16 %v1025
    %v1094 = vunpack.c.l.b16 %v1026
    %v1095 = vunpack.c.l.b16 %v1027
    %v1096 = vunpack.c.h.b16 %v1026
    %v1097 = vunpack.c.h.b16 %v1027
    %v1098 = vunpack.c.l.b16 %v1028
    %v1099 = vunpack.c.l.b16 %v1029
    %v1100 = vunpack.c.h.b16 %v1028
    %v1101 = vunpack.c.h.b16 %v1029
    %v1102 = vunpack.c.l.b16 %v1030
    %v1103 = vunpack.c.l.b16 %v1031
    %v1104 = vunpack.c.h.b16 %v1030
    %v1105 = vunpack.c.h.b16 %v1031
    %v1106 = vunpack.c.l.b16 %v1032
    %v1107 = vunpack.c.l.b16 %v1033
    %v1108 = vunpack.c.h.b16 %v1032
    %v1109 = vunpack.c.h.b16 %v1033
    %v1110 = vunpack.c.l.b16 %v1034
    %v1111 = vunpack.c.l.b16 %v1035
    %v1112 = vunpack.c.h.b16 %v1034
    %v1113 = vunpack.c.h.b16 %v1035
    %v1114 = vunpack.c.l.b16 %v1036
    %v1115 = vunpack.c.l.b16 %v1037
    %v1116 = vunpack.c.h.b16 %v1036
    %v1117 = vunpack.c.h.b16 %v1037
    %v1118 = vunpack.c.l.b16 %v1038
    %v1119 = vunpack.c.l.b16 %v1039
    %v1120 = vunpack.c.h.b16 %v1038
    %v1121 = vunpack.c.h.b16 %v1039
    %v1122 = vunpack.c.l.b16 %v1040
    %v1123 = vunpack.c.l.b16 %v1041
    %v1124 = vunpack.c.h.b16 %v1040
    %v1125 = vunpack.c.h.b16 %v1041
    %v1126 = vunpack.c.l.b16 %v1042
    %v1127 = vunpack.c.l.b16 %v1043
    %v1128 = vunpack.c.h.b16 %v1042
    %v1129 = vunpack.c.h.b16 %v1043
    %v1130 = vunpack.c.l.b16 %v1044
    %v1131 = vunpack.c.l.b16 %v1045
    %v1132 = vunpack.c.h.b16 %v1044
    %v1133 = vunpack.c.h.b16 %v1045
    %v1134 = vunpack.c.l.b16 %v1046
    %v1135 = vunpack.c.l.b16 %v1047
    %v1136 = vunpack.c.h.b16 %v1046
    %v1137 = vunpack.c.h.b16 %v1047
    %v1138 = vunpack.c.l.b16 %v1048
    %v1139 = vunpack.c.l.b16 %v1049
    %v1140 = vunpack.c.h.b16 %v1048
    %v1141 = vunpack.c.h.b16 %v1049
    %v1142 = vunpack.c.l.b16 %v1050
    %v1143 = vunpack.c.l.b16 %v1051
    %v1144 = vunpack.c.h.b16 %v1050
    %v1145 = vunpack.c.h.b16 %v1051
    %v1146 = vunpack.c.l.b16 %v1052
    %v1147 = vunpack.c.l.b16 %v1053
    %v1148 = vunpack.c.h.b16 %v1052
    %v1149 = vunpack.c.h.b16 %v1053
    %v1150 = vpack.c.b16 %v1087, %v1086
    %v1151 = vpack.c.b16 %v1089, %v1088
    %v1152 = vpack.c.b16 %v1091, %v1090
    %v1153 = vpack.c.b16 %v1093, %v1092
    %v1154 = vpack.c.b16 %v1095, %v1094
    %v1155 = vpack.c.b16 %v1097, %v1096
    %v1156 = vpack.c.b16 %v1099, %v1098
    %v1157 = vpack.c.b16 %v1101, %v1100
    %v1158 = vpack.c.b16 %v1103, %v1102
    %v1159 = vpack.c.b16 %v1105, %v1104
    %v1160 = vpack.c.b16 %v1107, %v1106
    %v1161 = vpack.c.b16 %v1109, %v1108
    %v1162 = vpack.c.b16 %v1111, %v1110
    %v1163 = vpack.c.b16 %v1113, %v1112
    %v1164 = vpack.c.b16 %v1115, %v1114
    %v1165 = vpack.c.b16 %v1117, %v1116
    %v1166 = vpack.c.b16 %v1119, %v1118
    %v1167 = vpack.c.b16 %v1121, %v1120
    %v1168 = vpack.c.b16 %v1123, %v1122
    %v1169 = vpack.c.b16 %v1125, %v1124
    %v1170 = vpack.c.b16 %v1127, %v1126
    %v1171 = vpack.c.b16 %v1129, %v1128
    %v1172 = vpack.c.b16 %v1131, %v1130
    %v1173 = vpack.c.b16 %v1133, %v1132
    %v1174 = vpack.c.b16 %v1135, %v1134
    %v1175 = vpack.c.b16 %v1137, %v1136
    %v1176 = vpack.c.b16 %v1139, %v1138
    %v1177 = vpack.c.b16 %v1141, %v1140
    %v1178 = vpack.c.b16 %v1143, %v1142
    %v1179 = vpack.c.b16 %v1145, %v1144
    %v1180 = vpack.c.b16 %v1147, %v1146
    %v1181 = vpack.c.b16 %v1149, %v1148
    %1214 = vst [vmem:[#allocation7] sm:$0xff] %v1150
    %1215 = vst [vmem:[#allocation7 + $0x8] sm:$0xff] %v1151
    %1216 = vst [vmem:[#allocation7 + $0x10] sm:$0xff] %v1152
    %1217 = vst [vmem:[#allocation7 + $0x18] sm:$0xff] %v1153
    %1218 = vst [vmem:[#allocation7 + $0x20] sm:$0xff] %v1154
    %1219 = vst [vmem:[#allocation7 + $0x28] sm:$0xff] %v1155
    %1220 = vst [vmem:[#allocation7 + $0x30] sm:$0xff] %v1156
    %1221 = vst [vmem:[#allocation7 + $0x38] sm:$0xff] %v1157
    %1222 = vst [vmem:[#allocation7 + $0x40] sm:$0xff] %v1158
    %1223 = vst [vmem:[#allocation7 + $0x48] sm:$0xff] %v1159
    %1224 = vst [vmem:[#allocation7 + $0x50] sm:$0xff] %v1160
    %1225 = vst [vmem:[#allocation7 + $0x58] sm:$0xff] %v1161
    %1226 = vst [vmem:[#allocation7 + $0x60] sm:$0xff] %v1162
    %1227 = vst [vmem:[#allocation7 + $0x68] sm:$0xff] %v1163
    %1228 = vst [vmem:[#allocation7 + $0x70] sm:$0xff] %v1164
    %1229 = vst [vmem:[#allocation7 + $0x78] sm:$0xff] %v1165
    %1230 = vst [vmem:[#allocation7 + $0x80] sm:$0xff] %v1166
    %1231 = vst [vmem:[#allocation7 + $0x88] sm:$0xff] %v1167
    %1232 = vst [vmem:[#allocation7 + $0x90] sm:$0xff] %v1168
    %1233 = vst [vmem:[#allocation7 + $0x98] sm:$0xff] %v1169
    %1234 = vst [vmem:[#allocation7 + $0xa0] sm:$0xff] %v1170
    %1235 = vst [vmem:[#allocation7 + $0xa8] sm:$0xff] %v1171
    %1236 = vst [vmem:[#allocation7 + $0xb0] sm:$0xff] %v1172
    %1237 = vst [vmem:[#allocation7 + $0xb8] sm:$0xff] %v1173
    %1238 = vst [vmem:[#allocation7 + $0xc0] sm:$0xff] %v1174
    %1239 = vst [vmem:[#allocation7 + $0xc8] sm:$0xff] %v1175
    %1240 = vst [vmem:[#allocation7 + $0xd0] sm:$0xff] %v1176
    %1241 = vst [vmem:[#allocation7 + $0xd8] sm:$0xff] %v1177
    %1242 = vst [vmem:[#allocation7 + $0xe0] sm:$0xff] %v1178
    %1243 = vst [vmem:[#allocation7 + $0xe8] sm:$0xff] %v1179
    %1244 = vst [vmem:[#allocation7 + $0xf0] sm:$0xff] %v1180
    %1245 = vst [vmem:[#allocation7 + $0xf8] sm:$0xff] %v1181
    %1246 = vst [vmem:[#allocation8] sm:$0xff] %v896
    %1247 = vst [vmem:[#allocation8 + $0x8] sm:$0xff] %v899
    %1248 = vst [vmem:[#allocation8 + $0x10] sm:$0xff] %v904
    %1249 = vst [vmem:[#allocation8 + $0x18] sm:$0xff] %v907
    %1250 = vst [vmem:[#allocation8 + $0x20] sm:$0xff] %v912
    %1251 = vst [vmem:[#allocation8 + $0x28] sm:$0xff] %v915
    %1252 = vst [vmem:[#allocation8 + $0x30] sm:$0xff] %v920
    %1253 = vst [vmem:[#allocation8 + $0x38] sm:$0xff] %v923
    %1254 = vst [vmem:[#allocation8 + $0x40] sm:$0xff] %v928
    %1255 = vst [vmem:[#allocation8 + $0x48] sm:$0xff] %v931
    %1256 = vst [vmem:[#allocation8 + $0x50] sm:$0xff] %v936
    %1257 = vst [vmem:[#allocation8 + $0x58] sm:$0xff] %v939
    %1258 = vst [vmem:[#allocation8 + $0x60] sm:$0xff] %v944
    %1259 = vst [vmem:[#allocation8 + $0x68] sm:$0xff] %v947
    %1260 = vst [vmem:[#allocation8 + $0x70] sm:$0xff] %v952
    %1261 = vst [vmem:[#allocation8 + $0x78] sm:$0xff] %v955
    %1262 = vst [vmem:[#allocation8 + $0x80] sm:$0xff] %v960
    %1263 = vst [vmem:[#allocation8 + $0x88] sm:$0xff] %v963
    %1264 = vst [vmem:[#allocation8 + $0x90] sm:$0xff] %v968
    %1265 = vst [vmem:[#allocation8 + $0x98] sm:$0xff] %v971
    %1266 = vst [vmem:[#allocation8 + $0xa0] sm:$0xff] %v976
    %1267 = vst [vmem:[#allocation8 + $0xa8] sm:$0xff] %v979
    %1268 = vst [vmem:[#allocation8 + $0xb0] sm:$0xff] %v984
    %1269 = vst [vmem:[#allocation8 + $0xb8] sm:$0xff] %v987
    %1270 = vst [vmem:[#allocation8 + $0xc0] sm:$0xff] %v992
    %1271 = vst [vmem:[#allocation8 + $0xc8] sm:$0xff] %v995
    %1272 = vst [vmem:[#allocation8 + $0xd0] sm:$0xff] %v1000
    %1273 = vst [vmem:[#allocation8 + $0xd8] sm:$0xff] %v1003
    %1274 = vst [vmem:[#allocation8 + $0xe0] sm:$0xff] %v1008
    %1275 = vst [vmem:[#allocation8 + $0xe8] sm:$0xff] %v1011
    %1276 = vst [vmem:[#allocation8 + $0xf0] sm:$0xff] %v1016
    %1277 = vst [vmem:[#allocation8 + $0xf8] sm:$0xff] %v1019
    // Predicated region
    $region18: #{tpu_custom_call.1} parent=1 // pred_check
      _
    $region19: #{tpu_custom_call.1} parent=1 // pred_check_branch
      %1279 = sbr.rel (0) target = $region21
    $region20: #{tpu_custom_call.1} parent=1 // pred_region
      %s1281 = ssub.s32 4096, 4096
      %1282 = vsyncadd [#allocation4], %s1281
      %s1283 = sshll.u32 [#allocation7], 4
      %s1284 = int_to_ptr.vmem [resolvable:$true] %s1283
      %1289 = dma.vmem_to_hbm [thread:$0]  %s1284, 4096, %s2, [#allocation4], 128, 128, 8
    $region21: #{tpu_custom_call.1} parent=1 // pred_fallthru
      _
    // Predicated region
    $region22: #{tpu_custom_call.1} parent=1 // pred_check
      _
    $region23: #{tpu_custom_call.1} parent=1 // pred_check_branch
      %1291 = sbr.rel (0) target = $region25
    $region24: #{tpu_custom_call.1} parent=1 // pred_region
      %s1293 = ssub.s32 4096, 4096
      %1294 = vsyncadd [#allocation9], %s1293
      %s1295 = sshll.u32 [#allocation8], 4
      %s1296 = int_to_ptr.vmem [resolvable:$true] %s1295
      %1301 = dma.vmem_to_hbm [thread:$0]  %s1296, 4096, %s3, [#allocation9], 128, 128, 8
    $region25: #{tpu_custom_call.1} parent=1 // pred_fallthru
      _
    // Predicated region
    $region26: #{tpu_custom_call.1} parent=1 // pred_check
      _
    $region27: #{tpu_custom_call.1} parent=1 // pred_check_branch
      %1303 = sbr.rel (0) target = $region29
    $region28: #{tpu_custom_call.1} parent=1 // pred_region
      %1304 = dma.done [#allocation4], 4096
    $region29: #{tpu_custom_call.1} parent=1 // pred_fallthru
      _
    // Predicated region
    $region30: #{tpu_custom_call.1} parent=1 // pred_check
      _
    $region31: #{tpu_custom_call.1} parent=1 // pred_check_branch
      %1306 = sbr.rel (0) target = $region33
    $region32: #{tpu_custom_call.1} parent=1 // pred_region
      %1307 = dma.done [#allocation9], 4096
    $region33: #{tpu_custom_call.1} parent=1 // pred_fallthru
      _
    %1308 = vsyncpa [#allocation3], 1
    %1309 = vsyncpa [#allocation6], 1
    %1310 = vsyncpa [#allocation4], 1
    %1311 = vsyncpa [#allocation9], 1

</llo_original>
